<compile_context>
chip_gen: v5e
topology: v5e:2x2
jax: 0.10.0
libtpu: 0.0.40
codegen_flags: <defaults>
</compile_context>

<pallas_src>
import jax
import jax.numpy as jnp
from jax.experimental import pallas as pl
from jax.experimental.pallas import tpu as pltpu

LANE = 128

_ACTIVATIONS = {
    "relu": lambda z: jnp.maximum(z, 0.0),
    "sigmoid": jax.nn.sigmoid,
}


def _round_up(x, m):
    return ((x + m - 1) // m) * m


def _pad2(arr, rows, cols):
    r, c = arr.shape
    return jnp.pad(arr, ((0, rows - r), (0, cols - c)))


# --------------------------------------------------------------------------- #
# Kernel 1: row-tiled feature transform  XW = X @ W  (layer 1 only)            #
# --------------------------------------------------------------------------- #
def _feature_transform_kernel(x_ref, w_ref, o_ref):
    # Small [tm,F]@[F,128] product; f32 inputs for precision (cost is negligible
    # next to the O(N^2) aggregation).  bf16 output feeds the streamed MXU pass.
    o_ref[...] = jnp.dot(
        x_ref[...], w_ref[...], preferred_element_type=jnp.float32
    ).astype(o_ref.dtype)


def _feature_transform(x_p, w_p, block_m):
    n_pad, f_pad = x_p.shape
    d = w_p.shape[1]
    return pl.pallas_call(
        _feature_transform_kernel,
        out_shape=jax.ShapeDtypeStruct((n_pad, d), jnp.bfloat16),
        grid=(n_pad // block_m,),
        in_specs=[
            pl.BlockSpec((block_m, f_pad), lambda i: (i, 0)),
            pl.BlockSpec((f_pad, d), lambda i: (0, 0)),
        ],
        out_specs=pl.BlockSpec((block_m, d), lambda i: (i, 0)),
        compiler_params=pltpu.CompilerParams(dimension_semantics=("parallel",)),
    )(x_p, w_p)


# --------------------------------------------------------------------------- #
# Kernel 2: streamed aggregation  act(A_hat @ XW + b) [@ W_next]               #
# --------------------------------------------------------------------------- #
def _aggregate(a_p, xw_bf16, b_p, block_m, block_k, *, act, w_next=None):
    """out = act(A_hat @ xw + b)            (f32 output)  if w_next is None
       out = (act(A_hat @ xw + b)) @ w_next (bf16 output)  otherwise (fused)."""
    n_pad = a_p.shape[0]
    d = xw_bf16.shape[1]
    fuse = w_next is not None
    d_out = w_next.shape[1] if fuse else d
    out_dtype = jnp.bfloat16 if fuse else jnp.float32
    activation = _ACTIVATIONS[act]
    grid = (n_pad // block_m, n_pad // block_k)

    def kernel(*refs):
        if fuse:
            a_ref, xw_ref, b_ref, w_ref, out_ref, acc_ref = refs
        else:
            a_ref, xw_ref, b_ref, out_ref, acc_ref = refs
        k = pl.program_id(1)

        @pl.when(k == 0)
        def _():
            acc_ref[...] = jnp.zeros_like(acc_ref)

        # bf16 x bf16 -> f32 accumulation on the MXU.
        acc_ref[...] += jnp.dot(
            a_ref[...], xw_ref[...], preferred_element_type=jnp.float32
        )

        @pl.when(k == pl.num_programs(1) - 1)
        def _():
            z = activation(acc_ref[...] + b_ref[...])  # f32 bias add + act (VPU)
            if fuse:
                # Fused next-layer feature transform; tiny per-tile matmul.
                out_ref[...] = jnp.dot(
                    z, w_ref[...], preferred_element_type=jnp.float32
                ).astype(out_ref.dtype)
            else:
                out_ref[...] = z.astype(out_ref.dtype)

    in_specs = [
        pl.BlockSpec((block_m, block_k), lambda i, k: (i, k)),
        pl.BlockSpec((block_k, d), lambda i, k: (k, 0)),
        pl.BlockSpec((1, d), lambda i, k: (0, 0)),
    ]
    args = [a_p, xw_bf16, b_p]
    if fuse:
        in_specs.append(pl.BlockSpec((d, d_out), lambda i, k: (0, 0)))
        args.append(w_next)

    out_bytes = 2 if fuse else 4
    # VMEM budget: double-buffered A / XW / out tiles + resident accumulator.
    vmem_need = (
        2 * block_m * block_k * 2          # A_hat tiles (bf16, 2 buffers)
        + 2 * block_k * d * 2              # XW tiles   (bf16, 2 buffers)
        + 2 * block_m * d_out * out_bytes  # out tiles  (2 buffers)
        + block_m * d * 4                  # f32 accumulator scratch
        + 2 * 8 * d * 4                    # bias tile (sublane-padded)
        + (2 * d * d_out * 4 if fuse else 0)  # resident W_next tile
    )
    vmem_limit = min(max(2 * vmem_need, 8 * 1024 * 1024), 48 * 1024 * 1024)

    cost = pl.CostEstimate(
        flops=2 * n_pad * n_pad * d + (2 * n_pad * d * d_out if fuse else 0),
        transcendentals=(n_pad * d if act == "sigmoid" else 0),
        bytes_accessed=(
            a_p.size * 2
            + xw_bf16.size * 2
            + n_pad * d_out * out_bytes
            + b_p.size * 4
            + (w_next.size * 4 if fuse else 0)
        ),
    )

    return pl.pallas_call(
        kernel,
        out_shape=jax.ShapeDtypeStruct((n_pad, d_out), out_dtype),
        grid_spec=pltpu.PrefetchScalarGridSpec(
            num_scalar_prefetch=0,
            grid=grid,
            in_specs=in_specs,
            out_specs=pl.BlockSpec((block_m, d_out), lambda i, k: (i, 0)),
            scratch_shapes=[pltpu.VMEM((block_m, d), jnp.float32)],
        ),
        compiler_params=pltpu.CompilerParams(
            dimension_semantics=("parallel", "arbitrary"),
            vmem_limit_bytes=vmem_limit,
        ),
        cost_estimate=cost,
    )(*args)


# --------------------------------------------------------------------------- #
# Forward pass                                                                 #
# --------------------------------------------------------------------------- #
def transaction_gnn_forward(a_hat, x, w1, b1, w2, b2, *, block_m=256, block_k=512):
    """TransactionGNN forward.  block_m / block_k must be multiples of 128 and
    powers of two (they are made to divide the padded node count)."""
    n, f = x.shape
    hidden = w1.shape[1]
    num_classes = w2.shape[1]

    n_pad = _round_up(n, max(block_m, block_k, 256))   # 256-aligned for v6e/v7x MXU
    f_pad = _round_up(f, LANE)
    h_pad = _round_up(hidden, LANE)
    c_pad = _round_up(num_classes, LANE)

    # Lane-pad everything; A_hat (the only O(N^2) tensor) goes to bf16.
    a_p = _pad2(a_hat.astype(jnp.float32), n_pad, n_pad).astype(jnp.bfloat16)
    x_p = _pad2(x.astype(jnp.float32), n_pad, f_pad)
    w1_p = _pad2(w1.astype(jnp.float32), f_pad, h_pad)
    b1_p = _pad2(b1.astype(jnp.float32), 1, h_pad)
    w2_p = _pad2(w2.astype(jnp.float32), h_pad, c_pad)
    b2_p = _pad2(b2.astype(jnp.float32), 1, c_pad)

    # Layer 1 feature transform: xw1 = X @ W1  (bf16 MXU operand)
    xw1 = _feature_transform(x_p, w1_p, block_m)                    # bf16 [n_pad, h_pad]

    # Fused: xw2 = relu(A_hat @ xw1 + b1) @ W2
    # F.dropout(x, training=self.training): inference semantics -> identity.
    # TODO(synk): add stochastic dropout via pltpu.prng_random_bits for training mode.
    xw2 = _aggregate(a_p, xw1, b1_p, block_m, block_k,
                     act="relu", w_next=w2_p)                       # bf16 [n_pad, c_pad]

    # Layer 2 aggregation: out = sigmoid(A_hat @ xw2 + b2)
    out_p = _aggregate(a_p, xw2, b2_p, block_m, block_k, act="sigmoid")

    return out_p[:n, :num_classes]


def build_normalized_adjacency(edge_index, num_nodes):
    """Dense D^{-1/2}(A + I)D^{-1/2}, edges flow src -> dst (PyG GCNConv)."""
    src, dst = edge_index[0], edge_index[1]
    loop = jnp.arange(num_nodes, dtype=edge_index.dtype)
    src = jnp.concatenate([src, loop])
    dst = jnp.concatenate([dst, loop])
    adj = jnp.zeros((num_nodes, num_nodes), jnp.float32).at[dst, src].add(1.0)
    deg = adj.sum(axis=1)  # in-degree incl. self-loops
    d_inv_sqrt = jnp.where(deg > 0.0, jax.lax.rsqrt(deg), 0.0)
    return d_inv_sqrt[:, None] * adj * d_inv_sqrt[None, :]


if __name__ == "__main__":
    key = jax.random.PRNGKey(0)

    # Synthetic graph mimicking the customer -> transaction -> merchant edges.
    num_customers = 8
    num_transactions = 16
    num_merchants = 8
    num_nodes = 64
    num_node_features = 16
    hidden_dim = 32
    num_classes = 4

    k_cust, k_merch, k_x, k_w1, k_b1, k_w2, k_b2 = jax.random.split(key, 7)

    customer_indices = jax.random.randint(
        k_cust, (num_transactions,), 0, num_customers, dtype=jnp.int32)
    transaction_indices = jnp.arange(num_transactions, dtype=jnp.int32)
    merchant_indices = jax.random.randint(
        k_merch, (num_transactions,), 0, num_merchants, dtype=jnp.int32) + num_customers

    edge_index_c2t = jnp.stack([customer_indices, transaction_indices], axis=0)
    edge_index_t2m = jnp.stack([transaction_indices, merchant_indices], axis=0)
    edge_index = jnp.concatenate([edge_index_c2t, edge_index_t2m], axis=1)

    # Node features and deterministic parameter init (GCNConv: weight + bias).
    x = jax.random.normal(k_x, (num_nodes, num_node_features), jnp.float32)
    w1 = jax.random.normal(k_w1, (num_node_features, hidden_dim), jnp.float32) * 0.1
    b1 = jax.random.normal(k_b1, (1, hidden_dim), jnp.float32) * 0.1
    w2 = jax.random.normal(k_w2, (hidden_dim, num_classes), jnp.float32) * 0.1
    b2 = jax.random.normal(k_b2, (1, num_classes), jnp.float32) * 0.1

    a_hat = build_normalized_adjacency(edge_index, num_nodes)

    # Small tiles (128) so the toy graph still exercises the multi-step
    # (parallel, arbitrary) grid, the accumulator init/finalize path, and the
    # fused next-layer transform.
    out = transaction_gnn_forward(a_hat, x, w1, b1, w2, b2,
                                  block_m=128, block_k=128)
    out = jax.block_until_ready(out)

    # Sanity check against plain-JAX f32 reference (bf16 MXU inputs -> loosened tol).
    h_ref = jnp.maximum(a_hat @ (x @ w1) + b1, 0.0)
    out_ref = jax.nn.sigmoid(a_hat @ (h_ref @ w2) + b2)
    assert out.shape == (num_nodes, num_classes)
    assert jnp.allclose(out, out_ref, atol=1e-2, rtol=1e-2)

    print("KERNEL_OK")
</pallas_src>

<mosaic_0001>
module attributes {stable_mosaic.version = 11 : i64} {
  func.func @_feature_transform_kernel(%arg0: i32, %arg1: memref<128x128xf32, #tpu.memory_space<vmem>>, %arg2: memref<128x128xf32, #tpu.memory_space<vmem>>, %arg3: memref<128x128xbf16, #tpu.memory_space<vmem>>) attributes {dimension_semantics = [#tpu.dimension_semantics<parallel>], iteration_bounds = array<i64: 2>, scalar_prefetch = 0 : i64, scratch_operands = 0 : i64, tpu.core_type = #tpu.core_type<tc>, window_params = [{transform_indices = @transform_0, window_bounds = array<i64: 128, 128>}, {pipeline_mode = #tpu.pipeline_mode<synchronous>, transform_indices = @transform_1, window_bounds = array<i64: 128, 128>}, {transform_indices = @transform_2, window_bounds = array<i64: 128, 128>}]} {
    %c0 = arith.constant 0 : index
    %c0_0 = arith.constant 0 : index
    %0 = vector.load %arg1[%c0, %c0_0] : memref<128x128xf32, #tpu.memory_space<vmem>>, vector<128x128xf32>
    %c0_1 = arith.constant 0 : index
    %c0_2 = arith.constant 0 : index
    %1 = vector.load %arg2[%c0_1, %c0_2] : memref<128x128xf32, #tpu.memory_space<vmem>>, vector<128x128xf32>
    %cst = arith.constant dense<0.000000e+00> : vector<128x128xf32>
    %2 = tpu.matmul %0, %1, %cst {dimension_numbers = #tpu.dot_dimension_numbers<[1], [0], [0], [1], [0, 0, 1, 1], [], []>} : vector<128x128xf32>, vector<128x128xf32>, vector<128x128xf32> -> vector<128x128xf32>
    %3 = arith.truncf %2 : vector<128x128xf32> to vector<128x128xbf16>
    %c0_3 = arith.constant 0 : index
    %c0_4 = arith.constant 0 : index
    %4 = vector.load %arg3[%c0_3, %c0_4] : memref<128x128xbf16, #tpu.memory_space<vmem>>, vector<128x128xbf16>
    tpu.vector_store %arg3[%c0_3, %c0_4], %3 {strides = array<i32>} : memref<128x128xbf16, #tpu.memory_space<vmem>>, vector<128x128xbf16>,
    return
  }
  func.func @transform_0(%arg0: i32) -> (i32, i32) {
    %c0_i32 = arith.constant 0 : i32
    %c0_i32_0 = arith.constant 0 : i32
    return %arg0, %c0_i32 : i32, i32
  }
  func.func @transform_1(%arg0: i32) -> (i32, i32) {
    %c0_i32 = arith.constant 0 : i32
    %c0_i32_0 = arith.constant 0 : i32
    %c0_i32_1 = arith.constant 0 : i32
    return %c0_i32, %c0_i32_0 : i32, i32
  }
  func.func @transform_2(%arg0: i32) -> (i32, i32) {
    %c0_i32 = arith.constant 0 : i32
    %c0_i32_0 = arith.constant 0 : i32
    return %arg0, %c0_i32 : i32, i32
  }
}

</mosaic_0001>

<llo_original>
// kernel: tpu_custom_call.1
$region0: #{tpu_custom_call.1}
  #allocation0 [shape = 'u32[]', space=smem, size = 0x4, offset = 0x4, fixed_abs, tag = 'smem constant byte address 0x4 - core index']
  #allocation1 [shape = 'u32[72,128]{1,0:T(1,128)}', space=vmem, size = 0x9000, scoped, tag = 'internal scratch']
  %s0 = inlined_call_operand.hbm [shape: f32[256,128], index: 0, kind: input, shape index: {}]
  %s1 = inlined_call_operand.hbm [shape: f32[128,128], index: 1, kind: input, shape index: {}]
  %s2 = inlined_call_operand.hbm [shape: bf16[256,128], index: 2, kind: output, shape index: {}]
  %s3 = sld [smem:[#allocation0]]
  $region49: #{tpu_custom_call.1} parent=0
    _
  %s5 = ssub.s32 1, %s3
  %s6 = scalar_select 0, %s5, %s3
  $region1: #{tpu_custom_call.1} parent=0
    #allocation2 [shape = 'u8[131072]{0}', space=vmem, size = 0x20000, scoped, tag = 'input window, operand 0']
    #allocation3 [shape = 's32[2]{0}', space=sflag, size = 0x8, scoped, tag = 'scoped memory for tpu_custom_call.1']
    #allocation4 [shape = 's32[2]{0}', space=sflag, size = 0x8, scoped, tag = 'scoped memory for tpu_custom_call.1']
    #allocation5 [shape = 'u8[65536]{0}', space=vmem, size = 0x10000, scoped, tag = 'input window, operand 1, single buffered']
    #allocation6 [shape = 's32[1]{0}', space=sflag, size = 0x4, scoped, tag = 'scoped memory for tpu_custom_call.1']
    #allocation7 [shape = 'u8[65536]{0}', space=vmem, size = 0x10000, scoped, tag = 'output window, operand 0']
    %7 = vsyncpa [#allocation3], 0
    %s8 = scalar_lea.sflag [#allocation3], 1
    %9 = vsyncpa %s8, 0
    %10 = vsyncpa [#allocation6], 0
    %11 = vsyncpa [#allocation4], 0
    %s12 = scalar_lea.sflag [#allocation4], 1
    %13 = vsyncpa %s12, 0
    loop: start=0, step=1, limit=4
    $region2: #{tpu_custom_call.1} parent=1 // loop_pre_header
      _
    $region3: #{tpu_custom_call.1} parent=1 // loop_header
      %s15 = sphi 0, %s19
      %p16 = scmp.ge.s32.totalorder %s15, 4
      %s25 = sphi 0, %s27
      %s28 = sphi 0, %s25
      %s29 = sphi 0, %s28
      %s45 = sphi 0, %s29
      %s49 = sphi 0, %s49
      %s51 = sphi 0, %s49
      %s52 = sphi 0, %s51
      %s66 = sphi 0, %s52
      %s72 = sphi 0, %s74
      %s75 = sphi 0, %s72
      %s76 = sphi 0, %s75
      %s92 = sphi 0, %s76
    $region4: #{tpu_custom_call.1} parent=1 // loop_header_branch
      %18 = sbr.rel (%p16) target = $region8
    $region5: #{tpu_custom_call.1} parent=1 // loop_body
      %s20 = ssub.s32 %s15, 1
      %s21 = ssub.s32 %s15, 2
      %s22 = sadd.s32 %s15, 1
      %s23 = ssub.s32 %s15, %s22
      %p24 = scmp.eq.s32.totalorder %s23, 0
      %s26 = sadd.s32 %s25, 1
      %s27 = scalar_select %p24, %s25, %s26
      %p30 = pneg %p24
      %p31 = scmp.eq.s32.totalorder %s15, 1
      %p32 = por %p30, %p31
      %p33 = scmp.ne.s32.totalorder %s25, %s28
      %p34 = scmp.eq.s32.totalorder %s15, 0
      %p35 = por %p33, %p34
      %p36 = scmp.ne.s32.totalorder %s25, %s28
      %p37 = scmp.eq.s32.totalorder %s20, 1
      %p38 = por %p36, %p37
      %p39 = scmp.ne.s32.totalorder %s28, %s29
      %p40 = scmp.eq.s32.totalorder %s20, 0
      %p41 = por %p39, %p40
      %p42 = scmp.ne.s32.totalorder %s28, %s29
      %p43 = scmp.eq.s32.totalorder %s21, 1
      %p44 = por %p42, %p43
      %p46 = scmp.ne.s32.totalorder %s29, %s45
      %p47 = scmp.eq.s32.totalorder %s21, 0
      %p48 = por %p46, %p47
      %s50 = sadd.s32 %s49, 1
      %p53 = scmp.eq.s32.totalorder %s15, 1
      %p54 = scmp.ne.s32.totalorder %s49, %s51
      %p55 = scmp.eq.s32.totalorder %s15, 0
      %p56 = por %p54, %p55
      %p57 = scmp.ne.s32.totalorder %s49, %s51
      %p58 = scmp.eq.s32.totalorder %s20, 1
      %p59 = por %p57, %p58
      %p60 = scmp.ne.s32.totalorder %s51, %s52
      %p61 = scmp.eq.s32.totalorder %s20, 0
      %p62 = por %p60, %p61
      %p63 = scmp.ne.s32.totalorder %s51, %s52
      %p64 = scmp.eq.s32.totalorder %s21, 1
      %p65 = por %p63, %p64
      %p67 = scmp.ne.s32.totalorder %s52, %s66
      %p68 = scmp.eq.s32.totalorder %s21, 0
      %p69 = por %p67, %p68
      %s70 = ssub.s32 %s15, %s22
      %p71 = scmp.eq.s32.totalorder %s70, 0
      %s73 = sadd.s32 %s72, 1
      %s74 = scalar_select %p71, %s72, %s73
      %p77 = pneg %p71
      %p78 = scmp.eq.s32.totalorder %s15, 1
      %p79 = por %p77, %p78
      %p80 = scmp.ne.s32.totalorder %s72, %s75
      %p81 = scmp.eq.s32.totalorder %s15, 0
      %p82 = por %p80, %p81
      %p83 = scmp.ne.s32.totalorder %s72, %s75
      %p84 = scmp.eq.s32.totalorder %s20, 1
      %p85 = por %p83, %p84
      %p86 = scmp.ne.s32.totalorder %s75, %s76
      %p87 = scmp.eq.s32.totalorder %s20, 0
      %p88 = por %p86, %p87
      %p89 = scmp.ne.s32.totalorder %s75, %s76
      %p90 = scmp.eq.s32.totalorder %s21, 1
      %p91 = por %p89, %p90
      %p93 = scmp.ne.s32.totalorder %s76, %s92
      %p94 = scmp.eq.s32.totalorder %s21, 0
      %p95 = por %p93, %p94
      %p96 = scmp.le.s32.totalorder 1, %s15
      %p97 = scmp.lt.s32.totalorder %s15, 3
      %p98 = pnand %p96, %p97
      %p99 = pneg %p98
      // Predicated region
      $region9: #{tpu_custom_call.1} parent=5 // pred_check
        _
      $region10: #{tpu_custom_call.1} parent=5 // pred_check_branch
        %101 = sbr.rel (%p98) target = $region12
      $region11: #{tpu_custom_call.1} parent=5 // pred_region
        %s102 = ssub.s32 %s15, 1
        // Predicated region
        $region13: #{tpu_custom_call.1} parent=11 // pred_check
          %p103 = pneg %p62
        $region14: #{tpu_custom_call.1} parent=11 // pred_check_branch
          %105 = sbr.rel (%p103) target = $region16
        $region15: #{tpu_custom_call.1} parent=11 // pred_region
          %107 = vsyncadd [#allocation6], 0
          %s108 = sshll.u32 %s1, 4
          %s109 = int_to_ptr.hbm [resolvable:$true] %s108
          %s110 = sshll.u32 [#allocation5], 4
          %s111 = int_to_ptr.vmem [resolvable:$true] %s110
          %116 = dma.hbm_to_vmem [thread:$0]  %s109, 2048, %s111, [#allocation6], 128, 128, 8
        $region16: #{tpu_custom_call.1} parent=11 // pred_fallthru
          _
      $region12: #{tpu_custom_call.1} parent=5 // pred_fallthru
        _
      %p117 = scmp.lt.s32.totalorder %s15, 2
      // Predicated region
      $region17: #{tpu_custom_call.1} parent=5 // pred_check
        %p118 = pneg %p117
      $region18: #{tpu_custom_call.1} parent=5 // pred_check_branch
        %120 = sbr.rel (%p118) target = $region20
      $region19: #{tpu_custom_call.1} parent=5 // pred_region
        // Predicated region
        $region21: #{tpu_custom_call.1} parent=19 // pred_check
          %p121 = pneg %p35
        $region22: #{tpu_custom_call.1} parent=19 // pred_check_branch
          %123 = sbr.rel (%p121) target = $region24
        $region23: #{tpu_custom_call.1} parent=19 // pred_region
          %s124 = sand.u32 %s25, 1
          %s125 = scalar_lea.sflag [#allocation3], %s124
          %s126 = sand.u32 %s25, 1
          %s127 = smul.addr %s126, 128
          %s128 = scalar_lea.vmem [#allocation2], %s127
          %s129 = smul.u32 16, %s15
          %131 = vsyncadd %s125, 0
          %s132 = smul.addr %s129, 8
          %s133 = scalar_lea.hbm %s0, %s132
          %s134 = sshll.u32 %s133, 4
          %s135 = int_to_ptr.hbm [resolvable:$true] %s134
          %s136 = sshll.u32 %s128, 4
          %s137 = int_to_ptr.vmem [resolvable:$true] %s136
          %142 = dma.hbm_to_vmem [thread:$0]  %s135, 2048, %s137, %s125, 128, 128, 8
        $region24: #{tpu_custom_call.1} parent=19 // pred_fallthru
          _
      $region20: #{tpu_custom_call.1} parent=5 // pred_fallthru
        _
      %p143 = scmp.le.s32.totalorder 1, %s15
      %p144 = scmp.lt.s32.totalorder %s15, 3
      %p145 = pnand %p143, %p144
      %p146 = pneg %p145
      // Predicated region
      $region25: #{tpu_custom_call.1} parent=5 // pred_check
        _
      $region26: #{tpu_custom_call.1} parent=5 // pred_check_branch
        %148 = sbr.rel (%p145) target = $region28
      $region27: #{tpu_custom_call.1} parent=5 // pred_region
        %s149 = ssub.s32 %s15, 1
        %s150 = sand.u32 %s28, 1
        %s151 = scalar_lea.sflag [#allocation3], %s150
        %s152 = sand.u32 %s28, 1
        %s153 = smul.addr %s152, 128
        %s154 = scalar_lea.vmem [#allocation2], %s153
        // Predicated region
        $region29: #{tpu_custom_call.1} parent=27 // pred_check
          %p155 = pneg %p41
        $region30: #{tpu_custom_call.1} parent=27 // pred_check_branch
          %157 = sbr.rel (%p155) target = $region32
        $region31: #{tpu_custom_call.1} parent=27 // pred_region
          %159 = dma.done %s151, 2048
        $region32: #{tpu_custom_call.1} parent=27 // pred_fallthru
          _
        // Predicated region
        $region33: #{tpu_custom_call.1} parent=27 // pred_check
          %p160 = pneg %p62
        $region34: #{tpu_custom_call.1} parent=27 // pred_check_branch
          %162 = sbr.rel (%p160) target = $region36
        $region35: #{tpu_custom_call.1} parent=27 // pred_region
          %164 = dma.done [#allocation6], 2048
        $region36: #{tpu_custom_call.1} parent=27 // pred_fallthru
          _
        %s165 = sand.u32 %s28, 1
        %s166 = scalar_lea.sflag [#allocation3], %s165
        %s167 = sand.u32 %s28, 1
        %s168 = smul.addr %s167, 128
        %s169 = scalar_lea.vmem [#allocation2], %s168
        %p170 = pneg %p41
        %p171 = pneg %p38
        %p172 = pneg %p62
        %p173 = pneg %p59
        %p174 = pneg %p88
        %p175 = pneg %p85
        %s176 = sand.u32 %s75, 1
        %s177 = scalar_lea.sflag [#allocation4], %s176
        %s178 = sand.u32 %s75, 1
        %s179 = smul.addr %s178, 64
        %s180 = scalar_lea.vmem [#allocation7], %s179
        %s181 = smul.u32 16, %s20
        %s182 = smul.u32 16, %s20
        %v183 = vld [vmem:[%s154] sm:$0xff]
        %v184 = vld [vmem:[%s154 + $0x8] sm:$0xff]
        %v185 = vld [vmem:[%s154 + $0x10] sm:$0xff]
        %v186 = vld [vmem:[%s154 + $0x18] sm:$0xff]
        %v187 = vld [vmem:[%s154 + $0x20] sm:$0xff]
        %v188 = vld [vmem:[%s154 + $0x28] sm:$0xff]
        %v189 = vld [vmem:[%s154 + $0x30] sm:$0xff]
        %v190 = vld [vmem:[%s154 + $0x38] sm:$0xff]
        %v191 = vld [vmem:[%s154 + $0x40] sm:$0xff]
        %v192 = vld [vmem:[%s154 + $0x48] sm:$0xff]
        %v193 = vld [vmem:[%s154 + $0x50] sm:$0xff]
        %v194 = vld [vmem:[%s154 + $0x58] sm:$0xff]
        %v195 = vld [vmem:[%s154 + $0x60] sm:$0xff]
        %v196 = vld [vmem:[%s154 + $0x68] sm:$0xff]
        %v197 = vld [vmem:[%s154 + $0x70] sm:$0xff]
        %v198 = vld [vmem:[%s154 + $0x78] sm:$0xff]
        %v199 = vld [vmem:[#allocation5] sm:$0xff]
        %v200 = vld [vmem:[#allocation5 + $0x8] sm:$0xff]
        %v201 = vld [vmem:[#allocation5 + $0x10] sm:$0xff]
        %v202 = vld [vmem:[#allocation5 + $0x18] sm:$0xff]
        %v203 = vld [vmem:[#allocation5 + $0x20] sm:$0xff]
        %v204 = vld [vmem:[#allocation5 + $0x28] sm:$0xff]
        %v205 = vld [vmem:[#allocation5 + $0x30] sm:$0xff]
        %v206 = vld [vmem:[#allocation5 + $0x38] sm:$0xff]
        %v207 = vld [vmem:[#allocation5 + $0x40] sm:$0xff]
        %v208 = vld [vmem:[#allocation5 + $0x48] sm:$0xff]
        %v209 = vld [vmem:[#allocation5 + $0x50] sm:$0xff]
        %v210 = vld [vmem:[#allocation5 + $0x58] sm:$0xff]
        %v211 = vld [vmem:[#allocation5 + $0x60] sm:$0xff]
        %v212 = vld [vmem:[#allocation5 + $0x68] sm:$0xff]
        %v213 = vld [vmem:[#allocation5 + $0x70] sm:$0xff]
        %v214 = vld [vmem:[#allocation5 + $0x78] sm:$0xff]
        %215 = vmatpush.msra.mxu0 %v214
        %216 = vmatpush.msra.mxu0 %v213
        %217 = vmatpush.msra.mxu0 %v212
        %218 = vmatpush.msra.mxu0 %v211
        %219 = vmatpush.msra.mxu0 %v210
        %220 = vmatpush.msra.mxu0 %v209
        %221 = vmatpush.msra.mxu0 %v208
        %222 = vmatpush.msra.mxu0 %v207
        %223 = vmatpush.msra.mxu0 %v206
        %224 = vmatpush.msra.mxu0 %v205
        %225 = vmatpush.msra.mxu0 %v204
        %226 = vmatpush.msra.mxu0 %v203
        %227 = vmatpush.msra.mxu0 %v202
        %228 = vmatpush.msra.mxu0 %v201
        %229 = vmatpush.msra.mxu0 %v200
        %230 = vmatpush.msra.mxu0 %v199
        %231 = vmatmul.f32.gmra.mxu0 %v183
        %v232 = vpop.f32.mrf.mxu0
        %v233 = vadd.f32 0.0, %v232
        %234 = vmatmul.f32.gmra.mxu0 %v184
        %v235 = vpop.f32.mrf.mxu0
        %v236 = vadd.f32 0.0, %v235
        %237 = vmatmul.f32.gmra.mxu0 %v185
        %v238 = vpop.f32.mrf.mxu0
        %v239 = vadd.f32 0.0, %v238
        %240 = vmatmul.f32.gmra.mxu0 %v186
        %v241 = vpop.f32.mrf.mxu0
        %v242 = vadd.f32 0.0, %v241
        %243 = vmatmul.f32.gmra.mxu0 %v187
        %v244 = vpop.f32.mrf.mxu0
        %v245 = vadd.f32 0.0, %v244
        %246 = vmatmul.f32.gmra.mxu0 %v188
        %v247 = vpop.f32.mrf.mxu0
        %v248 = vadd.f32 0.0, %v247
        %249 = vmatmul.f32.gmra.mxu0 %v189
        %v250 = vpop.f32.mrf.mxu0
        %v251 = vadd.f32 0.0, %v250
        %252 = vmatmul.f32.gmra.mxu0 %v190
        %v253 = vpop.f32.mrf.mxu0
        %v254 = vadd.f32 0.0, %v253
        %255 = vmatmul.f32.gmra.mxu0 %v191
        %v256 = vpop.f32.mrf.mxu0
        %v257 = vadd.f32 0.0, %v256
        %258 = vmatmul.f32.gmra.mxu0 %v192
        %v259 = vpop.f32.mrf.mxu0
        %v260 = vadd.f32 0.0, %v259
        %261 = vmatmul.f32.gmra.mxu0 %v193
        %v262 = vpop.f32.mrf.mxu0
        %v263 = vadd.f32 0.0, %v262
        %264 = vmatmul.f32.gmra.mxu0 %v194
        %v265 = vpop.f32.mrf.mxu0
        %v266 = vadd.f32 0.0, %v265
        %267 = vmatmul.f32.gmra.mxu0 %v195
        %v268 = vpop.f32.mrf.mxu0
        %v269 = vadd.f32 0.0, %v268
        %270 = vmatmul.f32.gmra.mxu0 %v196
        %v271 = vpop.f32.mrf.mxu0
        %v272 = vadd.f32 0.0, %v271
        %273 = vmatmul.f32.gmra.mxu0 %v197
        %v274 = vpop.f32.mrf.mxu0
        %v275 = vadd.f32 0.0, %v274
        %276 = vmatmul.f32.gmra.mxu0 %v198
        %v277 = vpop.f32.mrf.mxu0
        %v278 = vadd.f32 0.0, %v277
        %279 = vdwg.mxu0
        %v280 = vpack.c.bf16 %v233, %v233
        %v281 = vpack.c.bf16 %v236, %v236
        %v282 = vpack.c.bf16 %v239, %v239
        %v283 = vpack.c.bf16 %v242, %v242
        %v284 = vpack.c.bf16 %v245, %v245
        %v285 = vpack.c.bf16 %v248, %v248
        %v286 = vpack.c.bf16 %v251, %v251
        %v287 = vpack.c.bf16 %v254, %v254
        %v288 = vpack.c.bf16 %v257, %v257
        %v289 = vpack.c.bf16 %v260, %v260
        %v290 = vpack.c.bf16 %v263, %v263
        %v291 = vpack.c.bf16 %v266, %v266
        %v292 = vpack.c.bf16 %v269, %v269
        %v293 = vpack.c.bf16 %v272, %v272
        %v294 = vpack.c.bf16 %v275, %v275
        %v295 = vpack.c.bf16 %v278, %v278
        %296 = vst [vmem:[%s180] sm:$0xf] %v280
        %297 = vst [vmem:[%s180 + $0x4] sm:$0xf] %v281
        %298 = vst [vmem:[%s180 + $0x8] sm:$0xf] %v282
        %299 = vst [vmem:[%s180 + $0xc] sm:$0xf] %v283
        %300 = vst [vmem:[%s180 + $0x10] sm:$0xf] %v284
        %301 = vst [vmem:[%s180 + $0x14] sm:$0xf] %v285
        %302 = vst [vmem:[%s180 + $0x18] sm:$0xf] %v286
        %303 = vst [vmem:[%s180 + $0x1c] sm:$0xf] %v287
        %304 = vst [vmem:[%s180 + $0x20] sm:$0xf] %v288
        %305 = vst [vmem:[%s180 + $0x24] sm:$0xf] %v289
        %306 = vst [vmem:[%s180 + $0x28] sm:$0xf] %v290
        %307 = vst [vmem:[%s180 + $0x2c] sm:$0xf] %v291
        %308 = vst [vmem:[%s180 + $0x30] sm:$0xf] %v292
        %309 = vst [vmem:[%s180 + $0x34] sm:$0xf] %v293
        %310 = vst [vmem:[%s180 + $0x38] sm:$0xf] %v294
        %311 = vst [vmem:[%s180 + $0x3c] sm:$0xf] %v295
        %s312 = sand.u32 %s75, 1
        %s313 = scalar_lea.sflag [#allocation4], %s312
        %s314 = sand.u32 %s75, 1
        %s315 = smul.addr %s314, 64
        %s316 = scalar_lea.vmem [#allocation7], %s315
        // Predicated region
        $region37: #{tpu_custom_call.1} parent=27 // pred_check
          %p317 = pneg %p85
        $region38: #{tpu_custom_call.1} parent=27 // pred_check_branch
          %319 = sbr.rel (%p317) target = $region40
        $region39: #{tpu_custom_call.1} parent=27 // pred_region
          %s320 = smul.u32 16, %s20
          %322 = vsyncadd %s313, 0
          %s323 = smul.addr %s320, 4
          %s324 = scalar_lea.hbm %s2, %s323
          %s325 = sshll.u32 %s316, 4
          %s326 = int_to_ptr.vmem [resolvable:$true] %s325
          %s327 = sshll.u32 %s324, 4
          %s328 = int_to_ptr.hbm [resolvable:$true] %s327
          %333 = dma.vmem_to_hbm [thread:$0]  %s326, 1024, %s328, %s313, 64, 64, 4
        $region40: #{tpu_custom_call.1} parent=27 // pred_fallthru
          _
      $region28: #{tpu_custom_call.1} parent=5 // pred_fallthru
        _
      %p334 = scmp.le.s32.totalorder 2, %s15
      // Predicated region
      $region41: #{tpu_custom_call.1} parent=5 // pred_check
        %p335 = pneg %p334
      $region42: #{tpu_custom_call.1} parent=5 // pred_check_branch
        %337 = sbr.rel (%p335) target = $region44
      $region43: #{tpu_custom_call.1} parent=5 // pred_region
        %s338 = ssub.s32 %s15, 2
        // Predicated region
        $region45: #{tpu_custom_call.1} parent=43 // pred_check
          %p339 = pneg %p91
        $region46: #{tpu_custom_call.1} parent=43 // pred_check_branch
          %341 = sbr.rel (%p339) target = $region48
        $region47: #{tpu_custom_call.1} parent=43 // pred_region
          %s342 = sand.u32 %s76, 1
          %s343 = scalar_lea.sflag [#allocation4], %s342
          %s344 = sand.u32 %s76, 1
          %s345 = smul.addr %s344, 64
          %s346 = scalar_lea.vmem [#allocation7], %s345
          %348 = dma.done %s343, 1024
        $region48: #{tpu_custom_call.1} parent=43 // pred_fallthru
          _
      $region44: #{tpu_custom_call.1} parent=5 // pred_fallthru
        _
    $region6: #{tpu_custom_call.1} parent=1 // loop_footer
      %s19 = sadd.s32 1, %s15
    $region7: #{tpu_custom_call.1} parent=1 // loop_footer_branch
      %14 = sbr.rel target = $region3
    $region8: #{tpu_custom_call.1} parent=1 // loop_exit
      _
    %349 = vsyncpa [#allocation3], 1
    %s350 = scalar_lea.sflag [#allocation3], 1
    %351 = vsyncpa %s350, 1
    %352 = vsyncpa [#allocation6], 1
    %353 = vsyncpa [#allocation4], 1
    %s354 = scalar_lea.sflag [#allocation4], 1
    %355 = vsyncpa %s354, 1

</llo_original>
